<compile_context>
chip_gen: v6e
topology: v6e:2x2x1
jax: 0.10.0
libtpu: 0.0.40
codegen_flags: <defaults>
</compile_context>

<pallas_src>
import functools

import jax
import jax.numpy as jnp
from jax.experimental import pallas as pl
from jax.experimental.pallas import tpu as pltpu


def _round_up(x, m):
    return (x + m - 1) // m * m


def _cdiv(a, b):
    return (a + b - 1) // b


def _vmem_budgets():
    """(target_block_bytes, vmem_limit_bytes), tuned per TPU generation."""
    phys = None
    try:
        info = pltpu.get_tpu_info()
        phys = getattr(info, "vmem_capacity_bytes", None)
    except Exception:
        phys = None
    if phys is not None and phys >= (100 << 20):
        # v5e / v6e: 128 MiB physical VMEM -> generous scoped limit.
        return 8 << 20, 64 << 20
    # v7x (64 MiB physical per TensorCore) or unknown: stay conservative.
    return 8 << 20, 48 << 20


# ---------------- single-pass kernel: one full (n, c) plane per row ----------


def _bn_onepass_kernel(x_ref, bias_ref, o_ref, *, inv_hw):
    # x_ref/o_ref: (tr, HW) tile, one (n, c) plane per row (lane-dense).
    # bias_ref:    (tr, 1) f32 per-row bias.
    x = x_ref[...]                                                   # native dtype
    row_sum = jnp.sum(x, axis=-1, keepdims=True, dtype=jnp.float32)  # XLU reduce
    adj = bias_ref[...] - row_sum * inv_hw                           # (tr, 1) f32
    # x - mean + bias == x + (bias - mean); only the tiny column is cast.
    o_ref[...] = (x + adj.astype(x.dtype)).astype(o_ref.dtype)


# ---------------- two-pass kernels: HW tiled (very large spatial planes) -----


def _rowsum_kernel(x_ref, sums_ref, *, hw, thw, mask_tail):
    h = pl.program_id(1)

    @pl.when(h == 0)
    def _():
        sums_ref[...] = jnp.zeros_like(sums_ref)

    x = x_ref[...]
    if mask_tail:  # static: only when HW % thw != 0 (tail lanes are garbage)
        lane = jax.lax.broadcasted_iota(jnp.int32, x.shape, 1) + h * thw
        x = jnp.where(lane < hw, x, jnp.zeros_like(x))
    sums_ref[...] += jnp.sum(x, axis=-1, keepdims=True, dtype=jnp.float32)


def _apply_kernel(x_ref, adj_ref, o_ref):
    x = x_ref[...]
    o_ref[...] = (x + adj_ref[...].astype(x.dtype)).astype(o_ref.dtype)


# ---------------- wrapper -----------------------------------------------------


def mean_only_batch_norm(x, bias, *, target_block_bytes=None,
                         vmem_limit_bytes=None, force_two_pass=False):
    """x: (N, C, H, W); bias: (C,). Returns (N, C, H, W)."""
    N, C, H, W = x.shape
    HW = H * W
    R = N * C
    itemsize = jnp.dtype(x.dtype).itemsize
    sub = 8 if itemsize >= 4 else 16          # sublane pack width (f32 / 16-bit)

    tgt, vlim = _vmem_budgets()
    if target_block_bytes is not None:
        tgt = target_block_bytes
    if vmem_limit_bytes is not None:
        vlim = vmem_limit_bytes
    resident_budget = max(vlim - (8 << 20), 4 << 20)   # headroom for compiler scratch

    # Rows = (n, c) planes (reduction axis lane-dense); NO padding of the big tensor.
    x2 = x.reshape(R, HW)
    bias_rows = jnp.tile(bias.astype(jnp.float32), N).reshape(R, 1)   # tiny
    inv_hw = 1.0 / HW

    # A (tr, 1) f32 block is lane-padded to 128 lanes in VMEM: 512 B per row.
    bias_row_bytes = 128 * 4
    # Double-buffered x-in + x-out + bias, per row.
    per_row_resident = 2 * (2 * HW * itemsize + bias_row_bytes)

    one_pass = (not force_two_pass) and (sub * per_row_resident <= resident_budget)

    if one_pass:
        tr_budget = min(4 * tgt, resident_budget)
        tr = max(sub, (tr_budget // per_row_resident) // sub * sub)
        # Keep >=4 grid steps when R allows so v7x's two TensorCores both get work.
        tr = min(tr, max(sub, _round_up(_cdiv(R, 4), sub)))
        grid = (_cdiv(R, tr),)

        out2 = pl.pallas_call(
            functools.partial(_bn_onepass_kernel, inv_hw=inv_hw),
            out_shape=jax.ShapeDtypeStruct((R, HW), x.dtype),
            grid_spec=pltpu.PrefetchScalarGridSpec(
                num_scalar_prefetch=0,
                grid=grid,
                in_specs=[
                    pl.BlockSpec((tr, HW), lambda r: (r, 0)),
                    pl.BlockSpec((tr, 1), lambda r: (r, 0)),
                ],
                out_specs=pl.BlockSpec((tr, HW), lambda r: (r, 0)),
            ),
            input_output_aliases={0: 0},      # output reuses x2's HBM buffer
            cost_estimate=pl.CostEstimate(
                flops=2 * R * HW,
                transcendentals=0,
                bytes_accessed=2 * R * HW * itemsize + 2 * R * 4),
            compiler_params=pltpu.CompilerParams(
                dimension_semantics=("parallel",),
                vmem_limit_bytes=vlim),
        )(x2, bias_rows)
        return out2.reshape(N, C, H, W)

    # ---- two-pass fallback: HW too large for a full-row block in VMEM ----
    tr2 = max(sub, min(_round_up(R, sub), 8 * sub))
    thw = max(128, (tgt // (tr2 * itemsize)) // 128 * 128)
    if HW >= 128:
        thw = min(thw, HW if HW % 128 == 0 else (HW // 128) * 128)
    else:
        thw = HW                      # block last dim equals full array dim
    mask_tail = (HW % thw) != 0
    grid2 = (_cdiv(R, tr2), _cdiv(HW, thw))

    sums = pl.pallas_call(
        functools.partial(_rowsum_kernel, hw=HW, thw=thw, mask_tail=mask_tail),
        out_shape=jax.ShapeDtypeStruct((R, 1), jnp.float32),
        grid_spec=pltpu.PrefetchScalarGridSpec(
            num_scalar_prefetch=0,
            grid=grid2,
            in_specs=[pl.BlockSpec((tr2, thw), lambda r, h: (r, h))],
            out_specs=pl.BlockSpec((tr2, 1), lambda r, h: (r, 0)),  # resident acc
        ),
        compiler_params=pltpu.CompilerParams(
            dimension_semantics=("parallel", "arbitrary"),
            vmem_limit_bytes=vlim),
    )(x2)

    adj = bias_rows - sums * inv_hw            # (R, 1) f32, tiny JAX op

    out2 = pl.pallas_call(
        _apply_kernel,
        out_shape=jax.ShapeDtypeStruct((R, HW), x.dtype),
        grid_spec=pltpu.PrefetchScalarGridSpec(
            num_scalar_prefetch=0,
            grid=grid2,
            in_specs=[
                pl.BlockSpec((tr2, thw), lambda r, h: (r, h)),
                pl.BlockSpec((tr2, 1), lambda r, h: (r, 0)),
            ],
            out_specs=pl.BlockSpec((tr2, thw), lambda r, h: (r, h)),
        ),
        input_output_aliases={0: 0},
        compiler_params=pltpu.CompilerParams(
            dimension_semantics=("parallel", "parallel"),
            vmem_limit_bytes=vlim),
    )(x2, adj)
    return out2.reshape(N, C, H, W)


def _reference(x, bias):
    # Pure-JAX reference mirroring the PyTorch forward exactly.
    N, C, H, W = x.shape
    avg = jnp.mean(x.reshape(N, C, -1), axis=2)              # (N, C)
    out = x - avg[:, :, None, None]
    out = out + bias.reshape(1, C, 1, 1)
    return out


if __name__ == "__main__":
    key = jax.random.PRNGKey(0)
    k1, k2 = jax.random.split(key)

    # Main check: aligned small shape.
    N, C, H, W = 2, 4, 16, 16
    x = jax.random.normal(k1, (N, C, H, W), dtype=jnp.float32)
    # PyTorch zero-inits bias; use nonzero here so the bias path is exercised.
    bias = jnp.arange(C, dtype=jnp.float32) * 0.1
    ref = _reference(x, bias)
    out = jax.block_until_ready(mean_only_batch_norm(x, bias))
    assert out.shape == (N, C, H, W)
    assert jnp.allclose(out, ref, atol=1e-5, rtol=1e-5), "mismatch (aligned)"

    # Non-aligned tails: HW = 144 (not a multiple of 128), R = 10 (not of 8),
    # exercising the unpadded tail handling of the single-pass kernel.
    xb = jax.random.normal(k2, (2, 5, 12, 12), dtype=jnp.float32)
    bb = jnp.linspace(-0.3, 0.5, 5).astype(jnp.float32)
    refb = _reference(xb, bb)
    outb = jax.block_until_ready(mean_only_batch_norm(xb, bb))
    assert jnp.allclose(outb, refb, atol=1e-5, rtol=1e-5), "mismatch (tails)"

    # Force the HW-tiled two-pass fallback (used for huge spatial planes,
    # e.g. on v7x's 64 MiB VMEM) to validate it on-device as well.
    outc = jax.block_until_ready(
        mean_only_batch_norm(xb, bb, force_two_pass=True))
    assert jnp.allclose(outc, refb, atol=1e-5, rtol=1e-5), "mismatch (two-pass)"

    print("KERNEL_OK")
</pallas_src>

<mosaic_0001>
module attributes {stable_mosaic.version = 11 : i64} {
  func.func @_bn_onepass_kernel(%arg0: i32, %arg1: memref<8x256xf32, #tpu.memory_space<vmem>>, %arg2: memref<8x1xf32, #tpu.memory_space<vmem>>, %arg3: memref<8x256xf32, #tpu.memory_space<vmem>>) attributes {dimension_semantics = [#tpu.dimension_semantics<parallel>], iteration_bounds = array<i64: 1>, scalar_prefetch = 0 : i64, scratch_operands = 0 : i64, tpu.core_type = #tpu.core_type<tc>, window_params = [{transform_indices = @transform_0, window_bounds = array<i64: 8, 256>}, {transform_indices = @transform_1, window_bounds = array<i64: 8, 1>}, {transform_indices = @transform_2, window_bounds = array<i64: 8, 256>}]} {
    %c0 = arith.constant 0 : index
    %c0_0 = arith.constant 0 : index
    %0 = vector.load %arg1[%c0, %c0_0] : memref<8x256xf32, #tpu.memory_space<vmem>>, vector<8x256xf32>
    %cst = arith.constant dense<0.000000e+00> : vector<8xf32>
    %1 = vector.multi_reduction <add>, %0, %cst [1] : vector<8x256xf32> to vector<8xf32>
    %2 = vector.shape_cast %1 : vector<8xf32> to vector<8x1xf32>
    %c0_1 = arith.constant 0 : index
    %c0_2 = arith.constant 0 : index
    %3 = vector.load %arg2[%c0_1, %c0_2] : memref<8x1xf32, #tpu.memory_space<vmem>>, vector<8x1xf32>
    %cst_3 = arith.constant 3.906250e-03 : f32
    %4 = vector.broadcast %cst_3 : f32 to vector<8x1xf32>
    %5 = arith.mulf %2, %4 : vector<8x1xf32>
    %6 = arith.subf %3, %5 : vector<8x1xf32>
    %7 = vector.broadcast %6 : vector<8x1xf32> to vector<8x256xf32>
    %8 = arith.addf %0, %7 : vector<8x256xf32>
    %c0_4 = arith.constant 0 : index
    %c0_5 = arith.constant 0 : index
    %9 = vector.load %arg3[%c0_4, %c0_5] : memref<8x256xf32, #tpu.memory_space<vmem>>, vector<8x256xf32>
    tpu.vector_store %arg3[%c0_4, %c0_5], %8 {strides = array<i32>} : memref<8x256xf32, #tpu.memory_space<vmem>>, vector<8x256xf32>,
    return
  }
  func.func @transform_0(%arg0: i32) -> (i32, i32) {
    %c0_i32 = arith.constant 0 : i32
    %c0_i32_0 = arith.constant 0 : i32
    return %arg0, %c0_i32 : i32, i32
  }
  func.func @transform_1(%arg0: i32) -> (i32, i32) {
    %c0_i32 = arith.constant 0 : i32
    %c0_i32_0 = arith.constant 0 : i32
    return %arg0, %c0_i32 : i32, i32
  }
  func.func @transform_2(%arg0: i32) -> (i32, i32) {
    %c0_i32 = arith.constant 0 : i32
    %c0_i32_0 = arith.constant 0 : i32
    return %arg0, %c0_i32 : i32, i32
  }
}

</mosaic_0001>

<llo_original>
// kernel: tpu_custom_call.1
$region0: #{tpu_custom_call.1}
  #allocation0 [shape = 'u32[]', space=smem, size = 0x4, offset = 0x4, fixed_abs, tag = 'smem constant byte address 0x4 - core index']
  #allocation1 [shape = 'u32[144,128]{1,0:T(1,128)}', space=vmem, size = 0x12000, scoped, tag = 'internal scratch']
  %s0 = inlined_call_operand.hbm [shape: f32[8,256], index: 0, kind: input, shape index: {}, may-alias: {0,2}]
  %s1 = inlined_call_operand.vmem [shape: f32[8,1], index: 1, kind: input, shape index: {}]
  %s2 = inlined_call_operand.hbm [shape: f32[8,256], index: 2, kind: output, shape index: {}, may-alias: {0,2}]
  %s3 = sld [smem:[#allocation0]]
  $region22: #{tpu_custom_call.1} parent=0
    _
  %s5 = ssub.s32 1, %s3
  %s6 = scalar_select 0, %s5, %s3
  $region1: #{tpu_custom_call.1} parent=0
    #allocation2 [shape = 'u8[8192]{0}', space=vmem, size = 0x2000, scoped, tag = 'input window, operand 0, single buffered']
    #allocation3 [shape = 's32[1]{0}', space=sflag, size = 0x4, scoped, tag = 'scoped memory for tpu_custom_call.1']
    #allocation4 [shape = 's32[1]{0}', space=sflag, size = 0x4, scoped, tag = 'scoped memory for tpu_custom_call.1']
    #allocation5 [shape = 'u8[8192]{0}', space=vmem, size = 0x2000, scoped, tag = 'output window, operand 0, single buffered']
    %7 = vsyncpa [#allocation3], 0
    %8 = vsyncpa [#allocation4], 0
    // Predicated region
    $region2: #{tpu_custom_call.1} parent=1 // pred_check
      _
    $region3: #{tpu_custom_call.1} parent=1 // pred_check_branch
      %10 = sbr.rel (0) target = $region5
    $region4: #{tpu_custom_call.1} parent=1 // pred_region
      %s12 = ssub.s32 256, 256
      %13 = vsyncadd [#allocation3], %s12
      %s15 = sshll.u32 [#allocation2], 4
      %s16 = int_to_ptr.vmem [resolvable:$true] %s15
      %18 = dma.hbm_to_vmem [thread:$0]  %s0, 256, %s16, [#allocation3]
    $region5: #{tpu_custom_call.1} parent=1 // pred_fallthru
      _
    // Predicated region
    $region6: #{tpu_custom_call.1} parent=1 // pred_check
      _
    $region7: #{tpu_custom_call.1} parent=1 // pred_check_branch
      %20 = sbr.rel (0) target = $region9
    $region8: #{tpu_custom_call.1} parent=1 // pred_region
      _
    $region9: #{tpu_custom_call.1} parent=1 // pred_fallthru
      _
    // Predicated region
    $region10: #{tpu_custom_call.1} parent=1 // pred_check
      _
    $region11: #{tpu_custom_call.1} parent=1 // pred_check_branch
      %22 = sbr.rel (0) target = $region13
    $region12: #{tpu_custom_call.1} parent=1 // pred_region
      %23 = dma.done [#allocation3], 256
    $region13: #{tpu_custom_call.1} parent=1 // pred_fallthru
      _
    %v24 = vld [vmem:[#allocation2] sm:$0xff]
    %v25 = vld [vmem:[#allocation2 + $0x8] sm:$0xff]
    %v26 = vadd.f32 %v24, %v25
    %27 = vadd.xlane.f32.xlu0 %v26
    %v28 = vpop.xlane.xlu0 %27
    %v29 = vld [vmem:[%s1] sm:$0xff]
    %v30 = vmul.f32 %v28, 0.00390625
    %v31 = vsub.f32 %v29, %v30
    %33 = vset.pattern.permute.xlu0 0
    %34 = vperm.xlu0 %33, %v31
    %v35 = vpop.permute.xlu0 %34
    %v37 = vadd.f32 %v24, %v35
    %v38 = vadd.f32 %v25, %v35
    %39 = vst [vmem:[#allocation5] sm:$0xff] %v37
    %40 = vst [vmem:[#allocation5 + $0x8] sm:$0xff] %v38
    // Predicated region
    $region14: #{tpu_custom_call.1} parent=1 // pred_check
      _
    $region15: #{tpu_custom_call.1} parent=1 // pred_check_branch
      %42 = sbr.rel (0) target = $region17
    $region16: #{tpu_custom_call.1} parent=1 // pred_region
      %s44 = ssub.s32 256, 256
      %45 = vsyncadd [#allocation4], %s44
      %s47 = sshll.u32 [#allocation5], 4
      %s48 = int_to_ptr.vmem [resolvable:$true] %s47
      %50 = dma.vmem_to_hbm [thread:$0]  %s48, 256, %s2, [#allocation4]
    $region17: #{tpu_custom_call.1} parent=1 // pred_fallthru
      _
    // Predicated region
    $region18: #{tpu_custom_call.1} parent=1 // pred_check
      _
    $region19: #{tpu_custom_call.1} parent=1 // pred_check_branch
      %52 = sbr.rel (0) target = $region21
    $region20: #{tpu_custom_call.1} parent=1 // pred_region
      %53 = dma.done [#allocation4], 256
    $region21: #{tpu_custom_call.1} parent=1 // pred_fallthru
      _
    %54 = vsyncpa [#allocation3], 1
    %55 = vsyncpa [#allocation4], 1

</llo_original>
